<compile_context>
chip_gen: v5e
topology: v5e:2x2
jax: 0.10.0
libtpu: 0.0.40
codegen_flags: <defaults>
</compile_context>

<pallas_src>
import jax
import jax.numpy as jnp
from jax.experimental import pallas as pl
from jax.experimental.pallas import tpu as pltpu

N = 2
LATENT = 32
HID = 128
C3, H3, W3 = 64, 4, 4          # shape_to_return = (-1, 64, 4, 4)
NPIX = H3 * W3                 # 16
BN_EPS = 1e-5

ROWS1 = NPIX * N               # 32  rows after fc1 regroup    (4x4 map, 64 ch)
ROWS2 = ROWS1 * 4              # 128 rows after tconv3 regroup (8x8 map, 32 ch)
OUT_COLS = 64                  # tconv1 block-diagonal over tconv2 tap: 4 * 16
PSLAB_ROWS = 232               # packed parameter slab (see fold_params)


# ----------------------------------------------------------------------------
# Single fused Pallas kernel: entire decoder forward, VMEM-resident.
#
# Row/col conventions (undone once in JAX glue at the end):
#   a3 (32, 64):  row = p3*N + n,                  p3 = h3*4 + w3
#   a2 (128,32):  row = t3*32 + p3*N + n,          t3 = kh3*2 + kw3
#   o  (128,64):  rows as a2; col = t2*16 + q,     t2 = kh2*2 + kw2,
#                 q = (kh1*2+kw1)*3 + c for q < 12, cols 12..15 of each block = pad.
#
# Packed parameter slab p_ref (232, 128):
#   [  0: 32, :  ]  wfc2  (32,128)
#   [ 32: 96, :  ]  wk3   (64,128)   cols = (kh3,kw3,c32)
#   [ 96:128, :64]  wk2   (32, 64)   cols = (kh2,kw2,c16)
#   [128:192, :64]  wk1bd (64, 64)   block-diagonal over t2
#   [192:224, :64]  b3t   (32, 64)   fc1 bias, pixel-row layout
#   [224:232, :  ]  epilogue rows: bfc2, sc3, sh3, sc2, sh2, sc1, sh1, 0
# ----------------------------------------------------------------------------
def _decoder_fused_kernel(x_ref, wfc1_ref, p_ref, o_ref, a3_ref):
    f32 = jnp.float32

    # One aligned (8,128) load for all epilogue vectors.
    ep = p_ref[224:232, :]
    bfc2 = ep[0:1, :]
    sc3, sh3 = ep[1:2, :], ep[2:3, :]
    sc2, sh2 = ep[3:4, 0:64], ep[4:5, 0:64]
    sc1, sh1 = ep[5:6, 0:64], ep[6:7, 0:64]

    # decoder_fc2 + ReLU: (N, 32) @ (32, 128)
    h2 = jnp.maximum(
        jnp.dot(x_ref[...], p_ref[0:32, :], preferred_element_type=f32) + bfc2,
        0.0)

    # decoder_fc1 matmul; bias + ReLU are applied after the pixel regroup below
    # (columns of wfc1 are pre-permuted to (pixel, channel) order).
    h1 = jnp.dot(h2, wfc1_ref[...], preferred_element_type=f32)        # (N, 1024)

    # Regroup 1: (N, 16*64) -> (16*N, 64); pieces are only N=2 rows (sublane-
    # unaligned), so keep the tiny proven scratch-store loop for this one.
    for pix in range(NPIX):
        a3_ref[pix * N:(pix + 1) * N, :] = h1[:, pix * C3:(pix + 1) * C3]
    a3 = jnp.maximum(a3_ref[...] + p_ref[192:224, 0:64], 0.0)          # (32, 64)

    # tconv3 + BN32 + ReLU: (32, 64) @ (64, 128)
    y3 = jnp.maximum(
        jnp.dot(a3, p_ref[32:96, :], preferred_element_type=f32) * sc3 + sh3,
        0.0)                                                           # (32, 128)

    # Regroup 2: redistribute the 4 taps into rows — value-level lane slices
    # stacked along sublanes (tile-aligned 32-row pieces, no scratch round trip).
    a2 = jnp.concatenate([y3[:, t * 32:(t + 1) * 32] for t in range(4)],
                         axis=0)                                       # (128, 32)

    # tconv2 + BN16 + ReLU: (128, 32) @ (32, 64)
    y2 = jnp.maximum(
        jnp.dot(a2, p_ref[96:128, 0:64], preferred_element_type=f32) * sc2 + sh2,
        0.0)                                                           # (128, 64)

    # tconv1 + BN3 + ReLU, block-diagonal over the tconv2 tap: no third regroup,
    # and the output stays a compact (128, 64) block.
    o_ref[...] = jnp.maximum(
        jnp.dot(y2, p_ref[128:192, 0:64], preferred_element_type=f32) * sc1 + sh1,
        0.0)                                                           # (128, 64)


def decoder_forward(x, fp):
    """x: (N, LATENT) f32, fp: folded params -> (N, 3, 32, 32) f32 (NCHW)."""
    vmem = pl.BlockSpec(memory_space=pltpu.MemorySpace.VMEM)
    flops = 2 * (N * LATENT * HID            # fc2
                 + N * HID * (C3 * NPIX)     # fc1
                 + ROWS1 * C3 * 128          # tconv3
                 + ROWS2 * 32 * 64           # tconv2
                 + ROWS2 * 64 * 64)          # tconv1 (block-diagonal)
    bytes_acc = 4 * (N * LATENT + HID * C3 * NPIX + PSLAB_ROWS * 128
                     + ROWS2 * OUT_COLS)
    o = pl.pallas_call(
        _decoder_fused_kernel,
        out_shape=jax.ShapeDtypeStruct((ROWS2, OUT_COLS), jnp.float32),
        in_specs=[vmem, vmem, vmem],
        out_specs=vmem,
        scratch_shapes=[pltpu.VMEM((ROWS1, C3), jnp.float32)],   # a3 (8 KiB)
        cost_estimate=pl.CostEstimate(flops=flops, transcendentals=0,
                                      bytes_accessed=bytes_acc),
    )(x, fp["wfc1"], fp["pslab"])

    # Single composed un-shuffle (tiny, fuses in the same jit):
    # rows = (kh3, kw3, h3, w3, n); cols = (kh2, kw2, [kh1, kw1, c] + 4 pad)
    y = o.reshape(2, 2, H3, W3, N, 2, 2, 16)[..., :12]
    y = y.reshape(2, 2, H3, W3, N, 2, 2, 2, 2, 3)
    # -> (n, c, h3, kh3, kh2, kh1, w3, kw3, kw2, kw1); h32 = 8h3+4kh3+2kh2+kh1
    y = jnp.transpose(y, (4, 9, 2, 0, 5, 7, 3, 1, 6, 8))
    return y.reshape(N, 3, 8 * H3, 8 * W3)


# ----------------------------------------------------------------------------
# One-time parameter folding (outside the per-call path).
# ----------------------------------------------------------------------------
def fold_params(p):
    f32 = jnp.float32

    def bn_fold(bias, gamma, beta, rmean, rvar):
        scale = gamma / jnp.sqrt(rvar + BN_EPS)
        shift = beta + (bias - rmean) * scale      # conv bias folded into BN shift
        return scale.astype(f32), shift.astype(f32)

    def tconv_cols(Wt):
        # (Cin, Cout, 2, 2) -> (Cin, 4*Cout): col = (kh*2+kw)*Cout + cout
        cin, cout = Wt.shape[0], Wt.shape[1]
        return jnp.transpose(Wt, (0, 2, 3, 1)).reshape(cin, 4 * cout).astype(f32)

    wfc2 = p["W_fc2"].T.astype(f32)                                    # (32, 128)
    bfc2 = p["b_fc2"].astype(f32)                                      # (128,)

    # fc1: transpose weight and permute output columns from (c, pixel) to (pixel, c)
    wfc1 = (p["W_fc1"].T.reshape(HID, C3, NPIX).transpose(0, 2, 1)
            .reshape(HID, C3 * NPIX).astype(f32))                      # (128, 1024)
    # fc1 bias in pixel-row layout: row = p3*N + n (both batch copies equal)
    b3t = jnp.repeat(p["b_fc1"].reshape(C3, NPIX).T, N, axis=0).astype(f32)  # (32, 64)

    wk3 = tconv_cols(p["W_t3"])                                        # (64, 128)
    s32, t32 = bn_fold(p["b_t3"], p["g32"], p["be32"], p["m32"], p["v32"])
    sc3, sh3 = jnp.tile(s32, 4), jnp.tile(t32, 4)                      # (128,)

    wk2 = tconv_cols(p["W_t2"])                                        # (32, 64)
    s16, t16 = bn_fold(p["b_t2"], p["g16"], p["be16"], p["m16"], p["v16"])
    sc2, sh2 = jnp.tile(s16, 4), jnp.tile(t16, 4)                      # (64,)

    # tconv1: per-tap (16, 12) weight, padded to 16 cols, block-diagonal over t2
    wk1_tap = jnp.pad(tconv_cols(p["W_t1"]), ((0, 0), (0, 4)))         # (16, 16)
    wk1bd = jnp.kron(jnp.eye(4, dtype=f32), wk1_tap)                   # (64, 64)
    s3, t3 = bn_fold(p["b_t1"], p["g3"], p["be3"], p["m3"], p["v3"])
    sc1 = jnp.tile(jnp.pad(jnp.tile(s3, 4), (0, 4)), 4)                # (64,)
    sh1 = jnp.tile(jnp.pad(jnp.tile(t3, 4), (0, 4)), 4)                # (64,)

    # Pack everything except wfc1 into one lane-dense slab (3 input DMAs total).
    P = jnp.zeros((PSLAB_ROWS, 128), f32)
    P = P.at[0:32, :].set(wfc2)
    P = P.at[32:96, :].set(wk3)
    P = P.at[96:128, 0:64].set(wk2)
    P = P.at[128:192, 0:64].set(wk1bd)
    P = P.at[192:224, 0:64].set(b3t)
    P = P.at[224, :].set(bfc2)
    P = P.at[225, :].set(sc3)
    P = P.at[226, :].set(sh3)
    P = P.at[227, 0:64].set(sc2)
    P = P.at[228, 0:64].set(sh2)
    P = P.at[229, 0:64].set(sc1)
    P = P.at[230, 0:64].set(sh1)

    return {"wfc1": wfc1, "pslab": P}


# ----------------------------------------------------------------------------
# Pure-JAX reference (mirrors PyTorch semantics) for a correctness check.
# ----------------------------------------------------------------------------
def reference_forward(x, p):
    def lin(x, W, b):
        return jnp.maximum(x @ W.T + b, 0.0)

    def tconv_bn_relu(z, Wt, bt, gamma, beta, rmean, rvar):
        n, cin, hh, ww = z.shape
        cout = Wt.shape[1]
        out = jnp.zeros((n, cout, 2 * hh, 2 * ww), jnp.float32)
        for kh in range(2):
            for kw in range(2):
                tap = jnp.einsum("ncij,cd->ndij", z, Wt[:, :, kh, kw])
                out = out.at[:, :, kh::2, kw::2].set(tap)
        out = out + bt[None, :, None, None]
        scale = gamma / jnp.sqrt(rvar + BN_EPS)
        out = (out - rmean[None, :, None, None]) * scale[None, :, None, None] \
              + beta[None, :, None, None]
        return jnp.maximum(out, 0.0)

    h = lin(x, p["W_fc2"], p["b_fc2"])
    h = lin(h, p["W_fc1"], p["b_fc1"])
    z = h.reshape(N, C3, H3, W3)
    z = tconv_bn_relu(z, p["W_t3"], p["b_t3"], p["g32"], p["be32"], p["m32"], p["v32"])
    z = tconv_bn_relu(z, p["W_t2"], p["b_t2"], p["g16"], p["be16"], p["m16"], p["v16"])
    z = tconv_bn_relu(z, p["W_t1"], p["b_t1"], p["g3"], p["be3"], p["m3"], p["v3"])
    return z


# ----------------------------------------------------------------------------
# Deterministic parameter init
# ----------------------------------------------------------------------------
def init_params(key):
    ks = jax.random.split(key, 16)
    f = jnp.float32

    def nrm(k, shape, s=0.1):
        return (s * jax.random.normal(k, shape)).astype(f)

    p = {
        "W_fc2": nrm(ks[0], (HID, LATENT)),
        "b_fc2": nrm(ks[1], (HID,)),
        "W_fc1": nrm(ks[2], (C3 * H3 * W3, HID)),
        "b_fc1": nrm(ks[3], (C3 * H3 * W3,)),
        "W_t3": nrm(ks[4], (64, 32, 2, 2)),
        "b_t3": nrm(ks[5], (32,)),
        "W_t2": nrm(ks[6], (32, 16, 2, 2)),
        "b_t2": nrm(ks[7], (16,)),
        "W_t1": nrm(ks[8], (16, 3, 2, 2)),
        "b_t1": nrm(ks[9], (3,)),
    }
    for name, c, k in (("32", 32, ks[10]), ("16", 16, ks[11]), ("3", 3, ks[12])):
        k1, k2, k3, k4 = jax.random.split(k, 4)
        p["g" + name] = (1.0 + 0.1 * jax.random.normal(k1, (c,))).astype(f)
        p["be" + name] = (0.1 * jax.random.normal(k2, (c,))).astype(f)
        p["m" + name] = (0.1 * jax.random.normal(k3, (c,))).astype(f)
        p["v" + name] = (0.5 + jax.random.uniform(k4, (c,))).astype(f)
    return p


if __name__ == "__main__":
    key = jax.random.PRNGKey(0)
    kp, kx = jax.random.split(key)
    params = init_params(kp)
    x = jax.random.normal(kx, (N, LATENT), dtype=jnp.float32)

    folded = jax.tree_util.tree_map(jax.block_until_ready, fold_params(params))

    fwd = jax.jit(decoder_forward)
    out = jax.block_until_ready(fwd(x, folded))
    assert out.shape == (N, 3, 32, 32), out.shape

    ref = jax.block_until_ready(reference_forward(x, params))
    assert jnp.allclose(out, ref, rtol=1e-4, atol=1e-4), \
        float(jnp.max(jnp.abs(out - ref)))

    print("KERNEL_OK")
</pallas_src>

<mosaic_0001>
module attributes {stable_mosaic.version = 11 : i64} {
  func.func @_decoder_fused_kernel(%arg0: memref<2x32xf32, #tpu.memory_space<vmem>>, %arg1: memref<128x1024xf32, #tpu.memory_space<vmem>>, %arg2: memref<232x128xf32, #tpu.memory_space<vmem>>, %arg3: memref<128x64xf32, #tpu.memory_space<vmem>>, %arg4: memref<32x64xf32, #tpu.memory_space<vmem>>) attributes {dimension_semantics = [], scalar_prefetch = 0 : i64, scratch_operands = 1 : i64, tpu.core_type = #tpu.core_type<tc>} {
    %c224 = arith.constant 224 : index
    %c0 = arith.constant 0 : index
    %0 = vector.load %arg2[%c224, %c0] : memref<232x128xf32, #tpu.memory_space<vmem>>, vector<8x128xf32>
    %1 = vector.extract_strided_slice %0 {offsets = [0, 0], sizes = [1, 128], strides = [1, 1]} : vector<8x128xf32> to vector<1x128xf32>
    %2 = vector.extract_strided_slice %0 {offsets = [1, 0], sizes = [1, 128], strides = [1, 1]} : vector<8x128xf32> to vector<1x128xf32>
    %3 = vector.extract_strided_slice %0 {offsets = [2, 0], sizes = [1, 128], strides = [1, 1]} : vector<8x128xf32> to vector<1x128xf32>
    %4 = vector.extract_strided_slice %0 {offsets = [3, 0], sizes = [1, 64], strides = [1, 1]} : vector<8x128xf32> to vector<1x64xf32>
    %5 = vector.extract_strided_slice %0 {offsets = [4, 0], sizes = [1, 64], strides = [1, 1]} : vector<8x128xf32> to vector<1x64xf32>
    %6 = vector.extract_strided_slice %0 {offsets = [5, 0], sizes = [1, 64], strides = [1, 1]} : vector<8x128xf32> to vector<1x64xf32>
    %7 = vector.extract_strided_slice %0 {offsets = [6, 0], sizes = [1, 64], strides = [1, 1]} : vector<8x128xf32> to vector<1x64xf32>
    %c0_0 = arith.constant 0 : index
    %c0_1 = arith.constant 0 : index
    %8 = vector.load %arg0[%c0_0, %c0_1] : memref<2x32xf32, #tpu.memory_space<vmem>>, vector<2x32xf32>
    %c0_2 = arith.constant 0 : index
    %c0_3 = arith.constant 0 : index
    %9 = vector.load %arg2[%c0_2, %c0_3] : memref<232x128xf32, #tpu.memory_space<vmem>>, vector<32x128xf32>
    %cst = arith.constant dense<0.000000e+00> : vector<2x128xf32>
    %10 = tpu.matmul %8, %9, %cst {dimension_numbers = #tpu.dot_dimension_numbers<[1], [0], [0], [1], [0, 0, 1, 1], [], []>} : vector<2x32xf32>, vector<32x128xf32>, vector<2x128xf32> -> vector<2x128xf32>
    %11 = vector.broadcast %1 : vector<1x128xf32> to vector<2x128xf32>
    %12 = arith.addf %10, %11 : vector<2x128xf32>
    %cst_4 = arith.constant 0.000000e+00 : f32
    %13 = vector.broadcast %cst_4 : f32 to vector<2x128xf32>
    %14 = arith.maximumf %12, %13 : vector<2x128xf32>
    %c0_5 = arith.constant 0 : index
    %c0_6 = arith.constant 0 : index
    %15 = vector.load %arg1[%c0_5, %c0_6] : memref<128x1024xf32, #tpu.memory_space<vmem>>, vector<128x1024xf32>
    %cst_7 = arith.constant dense<0.000000e+00> : vector<2x1024xf32>
    %16 = tpu.matmul %14, %15, %cst_7 {dimension_numbers = #tpu.dot_dimension_numbers<[1], [0], [0], [1], [0, 0, 1, 1], [], []>} : vector<2x128xf32>, vector<128x1024xf32>, vector<2x1024xf32> -> vector<2x1024xf32>
    %17 = vector.extract_strided_slice %16 {offsets = [0, 0], sizes = [2, 64], strides = [1, 1]} : vector<2x1024xf32> to vector<2x64xf32>
    %c0_8 = arith.constant 0 : index
    %c0_9 = arith.constant 0 : index
    %18 = vector.load %arg4[%c0_8, %c0_9] : memref<32x64xf32, #tpu.memory_space<vmem>>, vector<2x64xf32>
    tpu.vector_store %arg4[%c0_8, %c0_9], %17 {strides = array<i32>} : memref<32x64xf32, #tpu.memory_space<vmem>>, vector<2x64xf32>,
    %19 = vector.extract_strided_slice %16 {offsets = [0, 64], sizes = [2, 64], strides = [1, 1]} : vector<2x1024xf32> to vector<2x64xf32>
    %c2 = arith.constant 2 : index
    %c0_10 = arith.constant 0 : index
    %20 = vector.load %arg4[%c2, %c0_10] : memref<32x64xf32, #tpu.memory_space<vmem>>, vector<2x64xf32>
    tpu.vector_store %arg4[%c2, %c0_10], %19 {strides = array<i32>} : memref<32x64xf32, #tpu.memory_space<vmem>>, vector<2x64xf32>,
    %21 = vector.extract_strided_slice %16 {offsets = [0, 128], sizes = [2, 64], strides = [1, 1]} : vector<2x1024xf32> to vector<2x64xf32>
    %c4 = arith.constant 4 : index
    %c0_11 = arith.constant 0 : index
    %22 = vector.load %arg4[%c4, %c0_11] : memref<32x64xf32, #tpu.memory_space<vmem>>, vector<2x64xf32>
    tpu.vector_store %arg4[%c4, %c0_11], %21 {strides = array<i32>} : memref<32x64xf32, #tpu.memory_space<vmem>>, vector<2x64xf32>,
    %23 = vector.extract_strided_slice %16 {offsets = [0, 192], sizes = [2, 64], strides = [1, 1]} : vector<2x1024xf32> to vector<2x64xf32>
    %c6 = arith.constant 6 : index
    %c0_12 = arith.constant 0 : index
    %24 = vector.load %arg4[%c6, %c0_12] : memref<32x64xf32, #tpu.memory_space<vmem>>, vector<2x64xf32>
    tpu.vector_store %arg4[%c6, %c0_12], %23 {strides = array<i32>} : memref<32x64xf32, #tpu.memory_space<vmem>>, vector<2x64xf32>,
    %25 = vector.extract_strided_slice %16 {offsets = [0, 256], sizes = [2, 64], strides = [1, 1]} : vector<2x1024xf32> to vector<2x64xf32>
    %c8 = arith.constant 8 : index
    %c0_13 = arith.constant 0 : index
    %26 = vector.load %arg4[%c8, %c0_13] : memref<32x64xf32, #tpu.memory_space<vmem>>, vector<2x64xf32>
    tpu.vector_store %arg4[%c8, %c0_13], %25 {strides = array<i32>} : memref<32x64xf32, #tpu.memory_space<vmem>>, vector<2x64xf32>,
    %27 = vector.extract_strided_slice %16 {offsets = [0, 320], sizes = [2, 64], strides = [1, 1]} : vector<2x1024xf32> to vector<2x64xf32>
    %c10 = arith.constant 10 : index
    %c0_14 = arith.constant 0 : index
    %28 = vector.load %arg4[%c10, %c0_14] : memref<32x64xf32, #tpu.memory_space<vmem>>, vector<2x64xf32>
    tpu.vector_store %arg4[%c10, %c0_14], %27 {strides = array<i32>} : memref<32x64xf32, #tpu.memory_space<vmem>>, vector<2x64xf32>,
    %29 = vector.extract_strided_slice %16 {offsets = [0, 384], sizes = [2, 64], strides = [1, 1]} : vector<2x1024xf32> to vector<2x64xf32>
    %c12 = arith.constant 12 : index
    %c0_15 = arith.constant 0 : index
    %30 = vector.load %arg4[%c12, %c0_15] : memref<32x64xf32, #tpu.memory_space<vmem>>, vector<2x64xf32>
    tpu.vector_store %arg4[%c12, %c0_15], %29 {strides = array<i32>} : memref<32x64xf32, #tpu.memory_space<vmem>>, vector<2x64xf32>,
    %31 = vector.extract_strided_slice %16 {offsets = [0, 448], sizes = [2, 64], strides = [1, 1]} : vector<2x1024xf32> to vector<2x64xf32>
    %c14 = arith.constant 14 : index
    %c0_16 = arith.constant 0 : index
    %32 = vector.load %arg4[%c14, %c0_16] : memref<32x64xf32, #tpu.memory_space<vmem>>, vector<2x64xf32>
    tpu.vector_store %arg4[%c14, %c0_16], %31 {strides = array<i32>} : memref<32x64xf32, #tpu.memory_space<vmem>>, vector<2x64xf32>,
    %33 = vector.extract_strided_slice %16 {offsets = [0, 512], sizes = [2, 64], strides = [1, 1]} : vector<2x1024xf32> to vector<2x64xf32>
    %c16 = arith.constant 16 : index
    %c0_17 = arith.constant 0 : index
    %34 = vector.load %arg4[%c16, %c0_17] : memref<32x64xf32, #tpu.memory_space<vmem>>, vector<2x64xf32>
    tpu.vector_store %arg4[%c16, %c0_17], %33 {strides = array<i32>} : memref<32x64xf32, #tpu.memory_space<vmem>>, vector<2x64xf32>,
    %35 = vector.extract_strided_slice %16 {offsets = [0, 576], sizes = [2, 64], strides = [1, 1]} : vector<2x1024xf32> to vector<2x64xf32>
    %c18 = arith.constant 18 : index
    %c0_18 = arith.constant 0 : index
    %36 = vector.load %arg4[%c18, %c0_18] : memref<32x64xf32, #tpu.memory_space<vmem>>, vector<2x64xf32>
    tpu.vector_store %arg4[%c18, %c0_18], %35 {strides = array<i32>} : memref<32x64xf32, #tpu.memory_space<vmem>>, vector<2x64xf32>,
    %37 = vector.extract_strided_slice %16 {offsets = [0, 640], sizes = [2, 64], strides = [1, 1]} : vector<2x1024xf32> to vector<2x64xf32>
    %c20 = arith.constant 20 : index
    %c0_19 = arith.constant 0 : index
    %38 = vector.load %arg4[%c20, %c0_19] : memref<32x64xf32, #tpu.memory_space<vmem>>, vector<2x64xf32>
    tpu.vector_store %arg4[%c20, %c0_19], %37 {strides = array<i32>} : memref<32x64xf32, #tpu.memory_space<vmem>>, vector<2x64xf32>,
    %39 = vector.extract_strided_slice %16 {offsets = [0, 704], sizes = [2, 64], strides = [1, 1]} : vector<2x1024xf32> to vector<2x64xf32>
    %c22 = arith.constant 22 : index
    %c0_20 = arith.constant 0 : index
    %40 = vector.load %arg4[%c22, %c0_20] : memref<32x64xf32, #tpu.memory_space<vmem>>, vector<2x64xf32>
    tpu.vector_store %arg4[%c22, %c0_20], %39 {strides = array<i32>} : memref<32x64xf32, #tpu.memory_space<vmem>>, vector<2x64xf32>,
    %41 = vector.extract_strided_slice %16 {offsets = [0, 768], sizes = [2, 64], strides = [1, 1]} : vector<2x1024xf32> to vector<2x64xf32>
    %c24 = arith.constant 24 : index
    %c0_21 = arith.constant 0 : index
    %42 = vector.load %arg4[%c24, %c0_21] : memref<32x64xf32, #tpu.memory_space<vmem>>, vector<2x64xf32>
    tpu.vector_store %arg4[%c24, %c0_21], %41 {strides = array<i32>} : memref<32x64xf32, #tpu.memory_space<vmem>>, vector<2x64xf32>,
    %43 = vector.extract_strided_slice %16 {offsets = [0, 832], sizes = [2, 64], strides = [1, 1]} : vector<2x1024xf32> to vector<2x64xf32>
    %c26 = arith.constant 26 : index
    %c0_22 = arith.constant 0 : index
    %44 = vector.load %arg4[%c26, %c0_22] : memref<32x64xf32, #tpu.memory_space<vmem>>, vector<2x64xf32>
    tpu.vector_store %arg4[%c26, %c0_22], %43 {strides = array<i32>} : memref<32x64xf32, #tpu.memory_space<vmem>>, vector<2x64xf32>,
    %45 = vector.extract_strided_slice %16 {offsets = [0, 896], sizes = [2, 64], strides = [1, 1]} : vector<2x1024xf32> to vector<2x64xf32>
    %c28 = arith.constant 28 : index
    %c0_23 = arith.constant 0 : index
    %46 = vector.load %arg4[%c28, %c0_23] : memref<32x64xf32, #tpu.memory_space<vmem>>, vector<2x64xf32>
    tpu.vector_store %arg4[%c28, %c0_23], %45 {strides = array<i32>} : memref<32x64xf32, #tpu.memory_space<vmem>>, vector<2x64xf32>,
    %47 = vector.extract_strided_slice %16 {offsets = [0, 960], sizes = [2, 64], strides = [1, 1]} : vector<2x1024xf32> to vector<2x64xf32>
    %c30 = arith.constant 30 : index
    %c0_24 = arith.constant 0 : index
    %48 = vector.load %arg4[%c30, %c0_24] : memref<32x64xf32, #tpu.memory_space<vmem>>, vector<2x64xf32>
    tpu.vector_store %arg4[%c30, %c0_24], %47 {strides = array<i32>} : memref<32x64xf32, #tpu.memory_space<vmem>>, vector<2x64xf32>,
    %c0_25 = arith.constant 0 : index
    %c0_26 = arith.constant 0 : index
    %49 = vector.load %arg4[%c0_25, %c0_26] : memref<32x64xf32, #tpu.memory_space<vmem>>, vector<32x64xf32>
    %c192 = arith.constant 192 : index
    %c0_27 = arith.constant 0 : index
    %50 = vector.load %arg2[%c192, %c0_27] : memref<232x128xf32, #tpu.memory_space<vmem>>, vector<32x64xf32>
    %51 = arith.addf %49, %50 : vector<32x64xf32>
    %cst_28 = arith.constant 0.000000e+00 : f32
    %52 = vector.broadcast %cst_28 : f32 to vector<32x64xf32>
    %53 = arith.maximumf %51, %52 : vector<32x64xf32>
    %c32 = arith.constant 32 : index
    %c0_29 = arith.constant 0 : index
    %54 = vector.load %arg2[%c32, %c0_29] : memref<232x128xf32, #tpu.memory_space<vmem>>, vector<64x128xf32>
    %cst_30 = arith.constant dense<0.000000e+00> : vector<32x128xf32>
    %55 = tpu.matmul %53, %54, %cst_30 {dimension_numbers = #tpu.dot_dimension_numbers<[1], [0], [0], [1], [0, 0, 1, 1], [], []>} : vector<32x64xf32>, vector<64x128xf32>, vector<32x128xf32> -> vector<32x128xf32>
    %56 = vector.broadcast %2 : vector<1x128xf32> to vector<32x128xf32>
    %57 = arith.mulf %55, %56 : vector<32x128xf32>
    %58 = vector.broadcast %3 : vector<1x128xf32> to vector<32x128xf32>
    %59 = arith.addf %57, %58 : vector<32x128xf32>
    %cst_31 = arith.constant 0.000000e+00 : f32
    %60 = vector.broadcast %cst_31 : f32 to vector<32x128xf32>
    %61 = arith.maximumf %59, %60 : vector<32x128xf32>
    %62 = vector.extract_strided_slice %61 {offsets = [0, 0], sizes = [32, 32], strides = [1, 1]} : vector<32x128xf32> to vector<32x32xf32>
    %63 = vector.extract_strided_slice %61 {offsets = [0, 32], sizes = [32, 32], strides = [1, 1]} : vector<32x128xf32> to vector<32x32xf32>
    %64 = vector.extract_strided_slice %61 {offsets = [0, 64], sizes = [32, 32], strides = [1, 1]} : vector<32x128xf32> to vector<32x32xf32>
    %65 = vector.extract_strided_slice %61 {offsets = [0, 96], sizes = [32, 32], strides = [1, 1]} : vector<32x128xf32> to vector<32x32xf32>
    %66 = tpu.concatenate %62, %63, %64, %65 in 0 : vector<32x32xf32>, vector<32x32xf32>, vector<32x32xf32>, vector<32x32xf32> -> vector<128x32xf32>
    %c96 = arith.constant 96 : index
    %c0_32 = arith.constant 0 : index
    %67 = vector.load %arg2[%c96, %c0_32] : memref<232x128xf32, #tpu.memory_space<vmem>>, vector<32x64xf32>
    %cst_33 = arith.constant dense<0.000000e+00> : vector<128x64xf32>
    %68 = tpu.matmul %66, %67, %cst_33 {dimension_numbers = #tpu.dot_dimension_numbers<[1], [0], [0], [1], [0, 0, 1, 1], [], []>} : vector<128x32xf32>, vector<32x64xf32>, vector<128x64xf32> -> vector<128x64xf32>
    %69 = vector.broadcast %4 : vector<1x64xf32> to vector<128x64xf32>
    %70 = arith.mulf %68, %69 : vector<128x64xf32>
    %71 = vector.broadcast %5 : vector<1x64xf32> to vector<128x64xf32>
    %72 = arith.addf %70, %71 : vector<128x64xf32>
    %cst_34 = arith.constant 0.000000e+00 : f32
    %73 = vector.broadcast %cst_34 : f32 to vector<128x64xf32>
    %74 = arith.maximumf %72, %73 : vector<128x64xf32>
    %c128 = arith.constant 128 : index
    %c0_35 = arith.constant 0 : index
    %75 = vector.load %arg2[%c128, %c0_35] : memref<232x128xf32, #tpu.memory_space<vmem>>, vector<64x64xf32>
    %cst_36 = arith.constant dense<0.000000e+00> : vector<128x64xf32>
    %76 = tpu.matmul %74, %75, %cst_36 {dimension_numbers = #tpu.dot_dimension_numbers<[1], [0], [0], [1], [0, 0, 1, 1], [], []>} : vector<128x64xf32>, vector<64x64xf32>, vector<128x64xf32> -> vector<128x64xf32>
    %77 = vector.broadcast %6 : vector<1x64xf32> to vector<128x64xf32>
    %78 = arith.mulf %76, %77 : vector<128x64xf32>
    %79 = vector.broadcast %7 : vector<1x64xf32> to vector<128x64xf32>
    %80 = arith.addf %78, %79 : vector<128x64xf32>
    %cst_37 = arith.constant 0.000000e+00 : f32
    %81 = vector.broadcast %cst_37 : f32 to vector<128x64xf32>
    %82 = arith.maximumf %80, %81 : vector<128x64xf32>
    %c0_38 = arith.constant 0 : index
    %c0_39 = arith.constant 0 : index
    %83 = vector.load %arg3[%c0_38, %c0_39] : memref<128x64xf32, #tpu.memory_space<vmem>>, vector<128x64xf32>
    tpu.vector_store %arg3[%c0_38, %c0_39], %82 {strides = array<i32>} : memref<128x64xf32, #tpu.memory_space<vmem>>, vector<128x64xf32>,
    return
  }
}

</mosaic_0001>

<llo_original>
// kernel: decoder_forward.1
$region0: #{decoder_forward.1}
  #allocation0 [shape = 'u32[]', space=smem, size = 0x4, offset = 0x4, fixed_abs, tag = 'smem constant byte address 0x4 - core index']
  #allocation1 [shape = 'u32[72,128]{1,0:T(1,128)}', space=vmem, size = 0x9000, scoped, tag = 'internal scratch']
  #allocation2 [shape = 'f32[32,64]{1,0:T(8,128)}', space=vmem, size = 0x4000, scoped, tag = 'scratch operand']
  %s0 = inlined_call_operand.hbm [shape: f32[2,32], index: 0, kind: input, shape index: {}]
  %s1 = inlined_call_operand.hbm [shape: f32[128,1024], index: 1, kind: input, shape index: {}]
  %s2 = inlined_call_operand.hbm [shape: f32[232,128], index: 2, kind: input, shape index: {}]
  %s3 = inlined_call_operand.vmem [shape: f32[128,64], index: 3, kind: output, shape index: {}]
  %s4 = sld [smem:[#allocation0]]
  $region34: #{decoder_forward.1} parent=0
    _
  %s6 = ssub.s32 1, %s4
  %s7 = scalar_select 0, %s6, %s4
  $region1: #{decoder_forward.1} parent=0
    #allocation3 [shape = 'u8[1024]{0}', space=vmem, size = 0x400, scoped, tag = 'input window, operand 0, single buffered']
    #allocation4 [shape = 's32[1]{0}', space=sflag, size = 0x4, scoped, tag = 'scoped memory for decoder_forward.1']
    #allocation5 [shape = 'u8[524288]{0}', space=vmem, size = 0x80000, scoped, tag = 'input window, operand 1, single buffered']
    #allocation6 [shape = 's32[1]{0}', space=sflag, size = 0x4, scoped, tag = 'scoped memory for decoder_forward.1']
    #allocation7 [shape = 'u8[118784]{0}', space=vmem, size = 0x1d000, scoped, tag = 'input window, operand 2, single buffered']
    %8 = vsyncpa [#allocation4], 0
    %9 = vsyncpa [#allocation6], 0
    // Predicated region
    $region2: #{decoder_forward.1} parent=1 // pred_check
      _
    $region3: #{decoder_forward.1} parent=1 // pred_check_branch
      %11 = sbr.rel (0) target = $region5
    $region4: #{decoder_forward.1} parent=1 // pred_region
      %13 = vsyncadd [#allocation4], 0
      %s15 = sshll.u32 %s0, 4
      %s16 = int_to_ptr.hbm [resolvable:$true] %s15
      %s17 = sshll.u32 [#allocation3], 4
      %s18 = int_to_ptr.vmem [resolvable:$true] %s17
      %20 = dma.hbm_to_vmem [thread:$0]  %s16, 32, %s18, [#allocation4]
    $region5: #{decoder_forward.1} parent=1 // pred_fallthru
      _
    // Predicated region
    $region6: #{decoder_forward.1} parent=1 // pred_check
      _
    $region7: #{decoder_forward.1} parent=1 // pred_check_branch
      %22 = sbr.rel (0) target = $region9
    $region8: #{decoder_forward.1} parent=1 // pred_region
      %24 = vsyncadd [#allocation6], 0
      %s25 = sshll.u32 %s1, 4
      %s26 = int_to_ptr.hbm [resolvable:$true] %s25
      %s27 = sshll.u32 [#allocation5], 4
      %s28 = int_to_ptr.vmem [resolvable:$true] %s27
      %33 = dma.hbm_to_vmem [thread:$0]  %s26, 16384, %s28, [#allocation6], 1024, 1024, 64
    $region9: #{decoder_forward.1} parent=1 // pred_fallthru
      _
    // Predicated region
    $region10: #{decoder_forward.1} parent=1 // pred_check
      _
    $region11: #{decoder_forward.1} parent=1 // pred_check_branch
      %35 = sbr.rel (0) target = $region13
    $region12: #{decoder_forward.1} parent=1 // pred_region
      %37 = vsyncadd [#allocation6], 0
      %s38 = sshll.u32 %s2, 4
      %s39 = int_to_ptr.hbm [resolvable:$true] %s38
      %s40 = sshll.u32 [#allocation7], 4
      %s41 = int_to_ptr.vmem [resolvable:$true] %s40
      %46 = dma.hbm_to_vmem [thread:$0]  %s39, 3712, %s41, [#allocation6], 128, 128, 8
    $region13: #{decoder_forward.1} parent=1 // pred_fallthru
      _
    // Predicated region
    $region14: #{decoder_forward.1} parent=1 // pred_check
      _
    $region15: #{decoder_forward.1} parent=1 // pred_check_branch
      %48 = sbr.rel (0) target = $region17
    $region16: #{decoder_forward.1} parent=1 // pred_region
      %50 = dma.done [#allocation4], 32
    $region17: #{decoder_forward.1} parent=1 // pred_fallthru
      _
    // Predicated region
    $region18: #{decoder_forward.1} parent=1 // pred_check
      _
    $region19: #{decoder_forward.1} parent=1 // pred_check_branch
      %52 = sbr.rel (0) target = $region21
    $region20: #{decoder_forward.1} parent=1 // pred_region
      %54 = dma.done [#allocation6], 16384
    $region21: #{decoder_forward.1} parent=1 // pred_fallthru
      _
    // Predicated region
    $region22: #{decoder_forward.1} parent=1 // pred_check
      _
    $region23: #{decoder_forward.1} parent=1 // pred_check_branch
      %56 = sbr.rel (0) target = $region25
    $region24: #{decoder_forward.1} parent=1 // pred_region
      %58 = dma.done [#allocation6], 3712
    $region25: #{decoder_forward.1} parent=1 // pred_fallthru
      _
    %v59 = vld [vmem:[#allocation7 + $0xe0] sm:$0xff]
    %v60 = vld [vmem:[#allocation3] sm:$0x3]
    %v61 = vld [vmem:[#allocation7] sm:$0xff]
    %v62 = vld [vmem:[#allocation7 + $0x8] sm:$0xff]
    %v63 = vld [vmem:[#allocation7 + $0x10] sm:$0xff]
    %v64 = vld [vmem:[#allocation7 + $0x18] sm:$0xff]
    %v65 = vperm.slane %v59, 0
    %vm66 = vcmask 261120
    %v68 = vsel %vm66, %v60, 0
    %70 = vmatpush.msra.mxu0 0.0
    %71 = vmatpush.msra.mxu0 0.0
    %72 = vmatpush.msra.mxu0 0.0
    %73 = vmatpush.msra.mxu0 0.0
    %74 = vmatpush.msra.mxu0 0.0
    %75 = vmatpush.msra.mxu0 0.0
    %76 = vmatpush.msra.mxu0 0.0
    %77 = vmatpush.msra.mxu0 0.0
    %78 = vmatpush.msra.mxu0 0.0
    %79 = vmatpush.msra.mxu0 0.0
    %80 = vmatpush.msra.mxu0 0.0
    %81 = vmatpush.msra.mxu0 0.0
    %82 = vmatpush.msra.mxu0 %v64
    %83 = vmatpush.msra.mxu0 %v63
    %84 = vmatpush.msra.mxu0 %v62
    %85 = vmatpush.msra.mxu0 %v61
    %86 = vmatmul.f32.gmra.mxu0 %v68
    %v87 = vpop.f32.mrf.mxu0
    %v88 = vadd.f32 %v65, %v87
    %89 = vdwg.mxu0
    %v90 = vmax.f32 %v88, 0.0
    %v91 = vld [vmem:[#allocation5] sm:$0xff]
    %v92 = vld [vmem:[#allocation5 + $0x8] sm:$0xff]
    %v93 = vld [vmem:[#allocation5 + $0x10] sm:$0xff]
    %v94 = vld [vmem:[#allocation5 + $0x18] sm:$0xff]
    %v95 = vld [vmem:[#allocation5 + $0x20] sm:$0xff]
    %v96 = vld [vmem:[#allocation5 + $0x28] sm:$0xff]
    %v97 = vld [vmem:[#allocation5 + $0x30] sm:$0xff]
    %v98 = vld [vmem:[#allocation5 + $0x38] sm:$0xff]
    %v99 = vld [vmem:[#allocation5 + $0x40] sm:$0xff]
    %v100 = vld [vmem:[#allocation5 + $0x48] sm:$0xff]
    %v101 = vld [vmem:[#allocation5 + $0x50] sm:$0xff]
    %v102 = vld [vmem:[#allocation5 + $0x58] sm:$0xff]
    %v103 = vld [vmem:[#allocation5 + $0x60] sm:$0xff]
    %v104 = vld [vmem:[#allocation5 + $0x68] sm:$0xff]
    %v105 = vld [vmem:[#allocation5 + $0x70] sm:$0xff]
    %v106 = vld [vmem:[#allocation5 + $0x78] sm:$0xff]
    %v107 = vld [vmem:[#allocation5 + $0x80] sm:$0xff]
    %v108 = vld [vmem:[#allocation5 + $0x88] sm:$0xff]
    %v109 = vld [vmem:[#allocation5 + $0x90] sm:$0xff]
    %v110 = vld [vmem:[#allocation5 + $0x98] sm:$0xff]
    %v111 = vld [vmem:[#allocation5 + $0xa0] sm:$0xff]
    %v112 = vld [vmem:[#allocation5 + $0xa8] sm:$0xff]
    %v113 = vld [vmem:[#allocation5 + $0xb0] sm:$0xff]
    %v114 = vld [vmem:[#allocation5 + $0xb8] sm:$0xff]
    %v115 = vld [vmem:[#allocation5 + $0xc0] sm:$0xff]
    %v116 = vld [vmem:[#allocation5 + $0xc8] sm:$0xff]
    %v117 = vld [vmem:[#allocation5 + $0xd0] sm:$0xff]
    %v118 = vld [vmem:[#allocation5 + $0xd8] sm:$0xff]
    %v119 = vld [vmem:[#allocation5 + $0xe0] sm:$0xff]
    %v120 = vld [vmem:[#allocation5 + $0xe8] sm:$0xff]
    %v121 = vld [vmem:[#allocation5 + $0xf0] sm:$0xff]
    %v122 = vld [vmem:[#allocation5 + $0xf8] sm:$0xff]
    %v123 = vld [vmem:[#allocation5 + $0x100] sm:$0xff]
    %v124 = vld [vmem:[#allocation5 + $0x108] sm:$0xff]
    %v125 = vld [vmem:[#allocation5 + $0x110] sm:$0xff]
    %v126 = vld [vmem:[#allocation5 + $0x118] sm:$0xff]
    %v127 = vld [vmem:[#allocation5 + $0x120] sm:$0xff]
    %v128 = vld [vmem:[#allocation5 + $0x128] sm:$0xff]
    %v129 = vld [vmem:[#allocation5 + $0x130] sm:$0xff]
    %v130 = vld [vmem:[#allocation5 + $0x138] sm:$0xff]
    %v131 = vld [vmem:[#allocation5 + $0x140] sm:$0xff]
    %v132 = vld [vmem:[#allocation5 + $0x148] sm:$0xff]
    %v133 = vld [vmem:[#allocation5 + $0x150] sm:$0xff]
    %v134 = vld [vmem:[#allocation5 + $0x158] sm:$0xff]
    %v135 = vld [vmem:[#allocation5 + $0x160] sm:$0xff]
    %v136 = vld [vmem:[#allocation5 + $0x168] sm:$0xff]
    %v137 = vld [vmem:[#allocation5 + $0x170] sm:$0xff]
    %v138 = vld [vmem:[#allocation5 + $0x178] sm:$0xff]
    %v139 = vld [vmem:[#allocation5 + $0x180] sm:$0xff]
    %v140 = vld [vmem:[#allocation5 + $0x188] sm:$0xff]
    %v141 = vld [vmem:[#allocation5 + $0x190] sm:$0xff]
    %v142 = vld [vmem:[#allocation5 + $0x198] sm:$0xff]
    %v143 = vld [vmem:[#allocation5 + $0x1a0] sm:$0xff]
    %v144 = vld [vmem:[#allocation5 + $0x1a8] sm:$0xff]
    %v145 = vld [vmem:[#allocation5 + $0x1b0] sm:$0xff]
    %v146 = vld [vmem:[#allocation5 + $0x1b8] sm:$0xff]
    %v147 = vld [vmem:[#allocation5 + $0x1c0] sm:$0xff]
    %v148 = vld [vmem:[#allocation5 + $0x1c8] sm:$0xff]
    %v149 = vld [vmem:[#allocation5 + $0x1d0] sm:$0xff]
    %v150 = vld [vmem:[#allocation5 + $0x1d8] sm:$0xff]
    %v151 = vld [vmem:[#allocation5 + $0x1e0] sm:$0xff]
    %v152 = vld [vmem:[#allocation5 + $0x1e8] sm:$0xff]
    %v153 = vld [vmem:[#allocation5 + $0x1f0] sm:$0xff]
    %v154 = vld [vmem:[#allocation5 + $0x1f8] sm:$0xff]
    %v155 = vld [vmem:[#allocation5 + $0x200] sm:$0xff]
    %v156 = vld [vmem:[#allocation5 + $0x208] sm:$0xff]
    %v157 = vld [vmem:[#allocation5 + $0x210] sm:$0xff]
    %v158 = vld [vmem:[#allocation5 + $0x218] sm:$0xff]
    %v159 = vld [vmem:[#allocation5 + $0x220] sm:$0xff]
    %v160 = vld [vmem:[#allocation5 + $0x228] sm:$0xff]
    %v161 = vld [vmem:[#allocation5 + $0x230] sm:$0xff]
    %v162 = vld [vmem:[#allocation5 + $0x238] sm:$0xff]
    %v163 = vld [vmem:[#allocation5 + $0x240] sm:$0xff]
    %v164 = vld [vmem:[#allocation5 + $0x248] sm:$0xff]
    %v165 = vld [vmem:[#allocation5 + $0x250] sm:$0xff]
    %v166 = vld [vmem:[#allocation5 + $0x258] sm:$0xff]
    %v167 = vld [vmem:[#allocation5 + $0x260] sm:$0xff]
    %v168 = vld [vmem:[#allocation5 + $0x268] sm:$0xff]
    %v169 = vld [vmem:[#allocation5 + $0x270] sm:$0xff]
    %v170 = vld [vmem:[#allocation5 + $0x278] sm:$0xff]
    %v171 = vld [vmem:[#allocation5 + $0x280] sm:$0xff]
    %v172 = vld [vmem:[#allocation5 + $0x288] sm:$0xff]
    %v173 = vld [vmem:[#allocation5 + $0x290] sm:$0xff]
    %v174 = vld [vmem:[#allocation5 + $0x298] sm:$0xff]
    %v175 = vld [vmem:[#allocation5 + $0x2a0] sm:$0xff]
    %v176 = vld [vmem:[#allocation5 + $0x2a8] sm:$0xff]
    %v177 = vld [vmem:[#allocation5 + $0x2b0] sm:$0xff]
    %v178 = vld [vmem:[#allocation5 + $0x2b8] sm:$0xff]
    %v179 = vld [vmem:[#allocation5 + $0x2c0] sm:$0xff]
    %v180 = vld [vmem:[#allocation5 + $0x2c8] sm:$0xff]
    %v181 = vld [vmem:[#allocation5 + $0x2d0] sm:$0xff]
    %v182 = vld [vmem:[#allocation5 + $0x2d8] sm:$0xff]
    %v183 = vld [vmem:[#allocation5 + $0x2e0] sm:$0xff]
    %v184 = vld [vmem:[#allocation5 + $0x2e8] sm:$0xff]
    %v185 = vld [vmem:[#allocation5 + $0x2f0] sm:$0xff]
    %v186 = vld [vmem:[#allocation5 + $0x2f8] sm:$0xff]
    %v187 = vld [vmem:[#allocation5 + $0x300] sm:$0xff]
    %v188 = vld [vmem:[#allocation5 + $0x308] sm:$0xff]
    %v189 = vld [vmem:[#allocation5 + $0x310] sm:$0xff]
    %v190 = vld [vmem:[#allocation5 + $0x318] sm:$0xff]
    %v191 = vld [vmem:[#allocation5 + $0x320] sm:$0xff]
    %v192 = vld [vmem:[#allocation5 + $0x328] sm:$0xff]
    %v193 = vld [vmem:[#allocation5 + $0x330] sm:$0xff]
    %v194 = vld [vmem:[#allocation5 + $0x338] sm:$0xff]
    %v195 = vld [vmem:[#allocation5 + $0x340] sm:$0xff]
    %v196 = vld [vmem:[#allocation5 + $0x348] sm:$0xff]
    %v197 = vld [vmem:[#allocation5 + $0x350] sm:$0xff]
    %v198 = vld [vmem:[#allocation5 + $0x358] sm:$0xff]
    %v199 = vld [vmem:[#allocation5 + $0x360] sm:$0xff]
    %v200 = vld [vmem:[#allocation5 + $0x368] sm:$0xff]
    %v201 = vld [vmem:[#allocation5 + $0x370] sm:$0xff]
    %v202 = vld [vmem:[#allocation5 + $0x378] sm:$0xff]
    %v203 = vld [vmem:[#allocation5 + $0x380] sm:$0xff]
    %v204 = vld [vmem:[#allocation5 + $0x388] sm:$0xff]
    %v205 = vld [vmem:[#allocation5 + $0x390] sm:$0xff]
    %v206 = vld [vmem:[#allocation5 + $0x398] sm:$0xff]
    %v207 = vld [vmem:[#allocation5 + $0x3a0] sm:$0xff]
    %v208 = vld [vmem:[#allocation5 + $0x3a8] sm:$0xff]
    %v209 = vld [vmem:[#allocation5 + $0x3b0] sm:$0xff]
    %v210 = vld [vmem:[#allocation5 + $0x3b8] sm:$0xff]
    %v211 = vld [vmem:[#allocation5 + $0x3c0] sm:$0xff]
    %v212 = vld [vmem:[#allocation5 + $0x3c8] sm:$0xff]
    %v213 = vld [vmem:[#allocation5 + $0x3d0] sm:$0xff]
    %v214 = vld [vmem:[#allocation5 + $0x3d8] sm:$0xff]
    %v215 = vld [vmem:[#allocation5 + $0x3e0] sm:$0xff]
    %v216 = vld [vmem:[#allocation5 + $0x3e8] sm:$0xff]
    %v217 = vld [vmem:[#allocation5 + $0x3f0] sm:$0xff]
    %v218 = vld [vmem:[#allocation5 + $0x3f8] sm:$0xff]
    %219 = vmatpush.msra.mxu0 %v211
    %220 = vmatpush.msra.mxu0 %v203
    %221 = vmatpush.msra.mxu0 %v195
    %222 = vmatpush.msra.mxu0 %v187
    %223 = vmatpush.msra.mxu0 %v179
    %224 = vmatpush.msra.mxu0 %v171
    %225 = vmatpush.msra.mxu0 %v163
    %226 = vmatpush.msra.mxu0 %v155
    %227 = vmatpush.msra.mxu0 %v147
    %228 = vmatpush.msra.mxu0 %v139
    %229 = vmatpush.msra.mxu0 %v131
    %230 = vmatpush.msra.mxu0 %v123
    %231 = vmatpush.msra.mxu0 %v115
    %232 = vmatpush.msra.mxu0 %v107
    %233 = vmatpush.msra.mxu0 %v99
    %234 = vmatpush.msra.mxu0 %v91
    %235 = vmatmul.f32.gmra.mxu0 %v90
    %v236 = vpop.f32.mrf.mxu0
    %v237 = vadd.f32 0.0, %v236
    %238 = vdwg.mxu0
    %239 = vmatpush.msra.mxu0 %v212
    %240 = vmatpush.msra.mxu0 %v204
    %241 = vmatpush.msra.mxu0 %v196
    %242 = vmatpush.msra.mxu0 %v188
    %243 = vmatpush.msra.mxu0 %v180
    %244 = vmatpush.msra.mxu0 %v172
    %245 = vmatpush.msra.mxu0 %v164
    %246 = vmatpush.msra.mxu0 %v156
    %247 = vmatpush.msra.mxu0 %v148
    %248 = vmatpush.msra.mxu0 %v140
    %249 = vmatpush.msra.mxu0 %v132
    %250 = vmatpush.msra.mxu0 %v124
    %251 = vmatpush.msra.mxu0 %v116
    %252 = vmatpush.msra.mxu0 %v108
    %253 = vmatpush.msra.mxu0 %v100
    %254 = vmatpush.msra.mxu0 %v92
    %255 = vmatmul.f32.gmra.mxu0 %v90
    %v256 = vpop.f32.mrf.mxu0
    %v257 = vadd.f32 0.0, %v256
    %258 = vdwg.mxu0
    %259 = vmatpush.msra.mxu0 %v213
    %260 = vmatpush.msra.mxu0 %v205
    %261 = vmatpush.msra.mxu0 %v197
    %262 = vmatpush.msra.mxu0 %v189
    %263 = vmatpush.msra.mxu0 %v181
    %264 = vmatpush.msra.mxu0 %v173
    %265 = vmatpush.msra.mxu0 %v165
    %266 = vmatpush.msra.mxu0 %v157
    %267 = vmatpush.msra.mxu0 %v149
    %268 = vmatpush.msra.mxu0 %v141
    %269 = vmatpush.msra.mxu0 %v133
    %270 = vmatpush.msra.mxu0 %v125
    %271 = vmatpush.msra.mxu0 %v117
    %272 = vmatpush.msra.mxu0 %v109
    %273 = vmatpush.msra.mxu0 %v101
    %274 = vmatpush.msra.mxu0 %v93
    %275 = vmatmul.f32.gmra.mxu0 %v90
    %v276 = vpop.f32.mrf.mxu0
    %v277 = vadd.f32 0.0, %v276
    %278 = vdwg.mxu0
    %279 = vmatpush.msra.mxu0 %v214
    %280 = vmatpush.msra.mxu0 %v206
    %281 = vmatpush.msra.mxu0 %v198
    %282 = vmatpush.msra.mxu0 %v190
    %283 = vmatpush.msra.mxu0 %v182
    %284 = vmatpush.msra.mxu0 %v174
    %285 = vmatpush.msra.mxu0 %v166
    %286 = vmatpush.msra.mxu0 %v158
    %287 = vmatpush.msra.mxu0 %v150
    %288 = vmatpush.msra.mxu0 %v142
    %289 = vmatpush.msra.mxu0 %v134
    %290 = vmatpush.msra.mxu0 %v126
    %291 = vmatpush.msra.mxu0 %v118
    %292 = vmatpush.msra.mxu0 %v110
    %293 = vmatpush.msra.mxu0 %v102
    %294 = vmatpush.msra.mxu0 %v94
    %295 = vmatmul.f32.gmra.mxu0 %v90
    %v296 = vpop.f32.mrf.mxu0
    %v297 = vadd.f32 0.0, %v296
    %298 = vdwg.mxu0
    %299 = vmatpush.msra.mxu0 %v215
    %300 = vmatpush.msra.mxu0 %v207
    %301 = vmatpush.msra.mxu0 %v199
    %302 = vmatpush.msra.mxu0 %v191
    %303 = vmatpush.msra.mxu0 %v183
    %304 = vmatpush.msra.mxu0 %v175
    %305 = vmatpush.msra.mxu0 %v167
    %306 = vmatpush.msra.mxu0 %v159
    %307 = vmatpush.msra.mxu0 %v151
    %308 = vmatpush.msra.mxu0 %v143
    %309 = vmatpush.msra.mxu0 %v135
    %310 = vmatpush.msra.mxu0 %v127
    %311 = vmatpush.msra.mxu0 %v119
    %312 = vmatpush.msra.mxu0 %v111
    %313 = vmatpush.msra.mxu0 %v103
    %314 = vmatpush.msra.mxu0 %v95
    %315 = vmatmul.f32.gmra.mxu0 %v90
    %v316 = vpop.f32.mrf.mxu0
    %v317 = vadd.f32 0.0, %v316
    %318 = vdwg.mxu0
    %319 = vmatpush.msra.mxu0 %v216
    %320 = vmatpush.msra.mxu0 %v208
    %321 = vmatpush.msra.mxu0 %v200
    %322 = vmatpush.msra.mxu0 %v192
    %323 = vmatpush.msra.mxu0 %v184
    %324 = vmatpush.msra.mxu0 %v176
    %325 = vmatpush.msra.mxu0 %v168
    %326 = vmatpush.msra.mxu0 %v160
    %327 = vmatpush.msra.mxu0 %v152
    %328 = vmatpush.msra.mxu0 %v144
    %329 = vmatpush.msra.mxu0 %v136
    %330 = vmatpush.msra.mxu0 %v128
    %331 = vmatpush.msra.mxu0 %v120
    %332 = vmatpush.msra.mxu0 %v112
    %333 = vmatpush.msra.mxu0 %v104
    %334 = vmatpush.msra.mxu0 %v96
    %335 = vmatmul.f32.gmra.mxu0 %v90
    %v336 = vpop.f32.mrf.mxu0
    %v337 = vadd.f32 0.0, %v336
    %338 = vdwg.mxu0
    %339 = vmatpush.msra.mxu0 %v217
    %340 = vmatpush.msra.mxu0 %v209
    %341 = vmatpush.msra.mxu0 %v201
    %342 = vmatpush.msra.mxu0 %v193
    %343 = vmatpush.msra.mxu0 %v185
    %344 = vmatpush.msra.mxu0 %v177
    %345 = vmatpush.msra.mxu0 %v169
    %346 = vmatpush.msra.mxu0 %v161
    %347 = vmatpush.msra.mxu0 %v153
    %348 = vmatpush.msra.mxu0 %v145
    %349 = vmatpush.msra.mxu0 %v137
    %350 = vmatpush.msra.mxu0 %v129
    %351 = vmatpush.msra.mxu0 %v121
    %352 = vmatpush.msra.mxu0 %v113
    %353 = vmatpush.msra.mxu0 %v105
    %354 = vmatpush.msra.mxu0 %v97
    %355 = vmatmul.f32.gmra.mxu0 %v90
    %v356 = vpop.f32.mrf.mxu0
    %v357 = vadd.f32 0.0, %v356
    %358 = vdwg.mxu0
    %359 = vmatpush.msra.mxu0 %v218
    %360 = vmatpush.msra.mxu0 %v210
    %361 = vmatpush.msra.mxu0 %v202
    %362 = vmatpush.msra.mxu0 %v194
    %363 = vmatpush.msra.mxu0 %v186
    %364 = vmatpush.msra.mxu0 %v178
    %365 = vmatpush.msra.mxu0 %v170
    %366 = vmatpush.msra.mxu0 %v162
    %367 = vmatpush.msra.mxu0 %v154
    %368 = vmatpush.msra.mxu0 %v146
    %369 = vmatpush.msra.mxu0 %v138
    %370 = vmatpush.msra.mxu0 %v130
    %371 = vmatpush.msra.mxu0 %v122
    %372 = vmatpush.msra.mxu0 %v114
    %373 = vmatpush.msra.mxu0 %v106
    %374 = vmatpush.msra.mxu0 %v98
    %375 = vmatmul.f32.gmra.mxu0 %v90
    %v376 = vpop.f32.mrf.mxu0
    %v377 = vadd.f32 0.0, %v376
    %378 = vdwg.mxu0
    %vm379 = vcmask 517120
    %380 = vst.msk [vmem:[#allocation2] sm:$0x3] %vm379, %v237
    %382 = vrot.lane.b32.xlu0 %v237, 64
    %v383 = vpop.permute.xlu0 %382
    %385 = vst.msk [vmem:[#allocation2 + $0x2] sm:$0x3] %vm379, %v383
    %386 = vst.msk [vmem:[#allocation2 + $0x4] sm:$0x3] %vm379, %v257
    %388 = vrot.lane.b32.xlu0 %v257, 64
    %v389 = vpop.permute.xlu0 %388
    %391 = vst.msk [vmem:[#allocation2 + $0x6] sm:$0x3] %vm379, %v389
    %392 = vst.msk [vmem:[#allocation2 + $0x8] sm:$0x3] %vm379, %v277
    %394 = vrot.lane.b32.xlu0 %v277, 64
    %v395 = vpop.permute.xlu0 %394
    %397 = vst.msk [vmem:[#allocation2 + $0xa] sm:$0x3] %vm379, %v395
    %398 = vst.msk [vmem:[#allocation2 + $0xc] sm:$0x3] %vm379, %v297
    %400 = vrot.lane.b32.xlu0 %v297, 64
    %v401 = vpop.permute.xlu0 %400
    %403 = vst.msk [vmem:[#allocation2 + $0xe] sm:$0x3] %vm379, %v401
    %404 = vst.msk [vmem:[#allocation2 + $0x10] sm:$0x3] %vm379, %v317
    %406 = vrot.lane.b32.xlu0 %v317, 64
    %v407 = vpop.permute.xlu0 %406
    %409 = vst.msk [vmem:[#allocation2 + $0x12] sm:$0x3] %vm379, %v407
    %410 = vst.msk [vmem:[#allocation2 + $0x14] sm:$0x3] %vm379, %v337
    %412 = vrot.lane.b32.xlu0 %v337, 64
    %v413 = vpop.permute.xlu0 %412
    %415 = vst.msk [vmem:[#allocation2 + $0x16] sm:$0x3] %vm379, %v413
    %416 = vst.msk [vmem:[#allocation2 + $0x18] sm:$0x3] %vm379, %v357
    %418 = vrot.lane.b32.xlu0 %v357, 64
    %v419 = vpop.permute.xlu0 %418
    %421 = vst.msk [vmem:[#allocation2 + $0x1a] sm:$0x3] %vm379, %v419
    %422 = vst.msk [vmem:[#allocation2 + $0x1c] sm:$0x3] %vm379, %v377
    %424 = vrot.lane.b32.xlu0 %v377, 64
    %v425 = vpop.permute.xlu0 %424
    %427 = vst.msk [vmem:[#allocation2 + $0x1e] sm:$0x3] %vm379, %v425
    %v428 = vld [vmem:[#allocation2] sm:$0xff]
    %v429 = vld [vmem:[#allocation2 + $0x8] sm:$0xff]
    %v430 = vld [vmem:[#allocation2 + $0x10] sm:$0xff]
    %v431 = vld [vmem:[#allocation2 + $0x18] sm:$0xff]
    %v432 = vld [vmem:[#allocation7 + $0xc0] sm:$0xff]
    %v433 = vld [vmem:[#allocation7 + $0xc8] sm:$0xff]
    %v434 = vld [vmem:[#allocation7 + $0xd0] sm:$0xff]
    %v435 = vld [vmem:[#allocation7 + $0xd8] sm:$0xff]
    %v436 = vadd.f32 %v428, %v432
    %v437 = vadd.f32 %v429, %v433
    %v438 = vadd.f32 %v430, %v434
    %v439 = vadd.f32 %v431, %v435
    %v440 = vmax.f32 %v436, 0.0
    %v441 = vmax.f32 %v437, 0.0
    %v442 = vmax.f32 %v438, 0.0
    %v443 = vmax.f32 %v439, 0.0
    %v444 = vld [vmem:[#allocation7 + $0x20] sm:$0xff]
    %v445 = vld [vmem:[#allocation7 + $0x28] sm:$0xff]
    %v446 = vld [vmem:[#allocation7 + $0x30] sm:$0xff]
    %v447 = vld [vmem:[#allocation7 + $0x38] sm:$0xff]
    %v448 = vld [vmem:[#allocation7 + $0x40] sm:$0xff]
    %v449 = vld [vmem:[#allocation7 + $0x48] sm:$0xff]
    %v450 = vld [vmem:[#allocation7 + $0x50] sm:$0xff]
    %v451 = vld [vmem:[#allocation7 + $0x58] sm:$0xff]
    %vm452 = vcmask 523264
    %v454 = vsel %vm452, %v440, 0
    %v457 = vsel %vm452, %v441, 0
    %v460 = vsel %vm452, %v442, 0
    %v463 = vsel %vm452, %v443, 0
    %465 = vmatpush.msra.mxu0 0.0
    %466 = vmatpush.msra.mxu0 0.0
    %467 = vmatpush.msra.mxu0 0.0
    %468 = vmatpush.msra.mxu0 0.0
    %469 = vmatpush.msra.mxu0 0.0
    %470 = vmatpush.msra.mxu0 0.0
    %471 = vmatpush.msra.mxu0 0.0
    %472 = vmatpush.msra.mxu0 0.0
    %473 = vmatpush.msra.mxu0 %v451
    %474 = vmatpush.msra.mxu0 %v450
    %475 = vmatpush.msra.mxu0 %v449
    %476 = vmatpush.msra.mxu0 %v448
    %477 = vmatpush.msra.mxu0 %v447
    %478 = vmatpush.msra.mxu0 %v446
    %479 = vmatpush.msra.mxu0 %v445
    %480 = vmatpush.msra.mxu0 %v444
    %481 = vmatmul.f32.gmra.mxu0 %v454
    %v482 = vpop.f32.mrf.mxu0
    %v483 = vadd.f32 0.0, %v482
    %484 = vmatmul.f32.gmra.mxu0 %v457
    %v485 = vpop.f32.mrf.mxu0
    %v486 = vadd.f32 0.0, %v485
    %487 = vmatmul.f32.gmra.mxu0 %v460
    %v488 = vpop.f32.mrf.mxu0
    %v489 = vadd.f32 0.0, %v488
    %490 = vmatmul.f32.gmra.mxu0 %v463
    %v491 = vpop.f32.mrf.mxu0
    %v492 = vadd.f32 0.0, %v491
    %493 = vdwg.mxu0
    %v494 = vperm.slane %v59, 1
    %v495 = vmul.f32 %v483, %v494
    %v496 = vmul.f32 %v486, %v494
    %v497 = vmul.f32 %v489, %v494
    %v498 = vmul.f32 %v492, %v494
    %v499 = vperm.slane %v59, 2
    %v500 = vadd.f32 %v495, %v499
    %v501 = vadd.f32 %v496, %v499
    %v502 = vadd.f32 %v497, %v499
    %v503 = vadd.f32 %v498, %v499
    %v504 = vmax.f32 %v500, 0.0
    %v505 = vmax.f32 %v501, 0.0
    %v506 = vmax.f32 %v502, 0.0
    %v507 = vmax.f32 %v503, 0.0
    %512 = vrot.lane.b32.xlu0 %v504, 96
    %v513 = vpop.permute.xlu0 %512
    %514 = vrot.lane.b32.xlu0 %v505, 96
    %v515 = vpop.permute.xlu0 %514
    %516 = vrot.lane.b32.xlu0 %v506, 96
    %v517 = vpop.permute.xlu0 %516
    %518 = vrot.lane.b32.xlu0 %v507, 96
    %v519 = vpop.permute.xlu0 %518
    %520 = vrot.lane.b32.xlu0 %v504, 64
    %v521 = vpop.permute.xlu0 %520
    %522 = vrot.lane.b32.xlu0 %v505, 64
    %v523 = vpop.permute.xlu0 %522
    %524 = vrot.lane.b32.xlu0 %v506, 64
    %v525 = vpop.permute.xlu0 %524
    %526 = vrot.lane.b32.xlu0 %v507, 64
    %v527 = vpop.permute.xlu0 %526
    %528 = vrot.lane.b32.xlu0 %v504, 32
    %v529 = vpop.permute.xlu0 %528
    %530 = vrot.lane.b32.xlu0 %v505, 32
    %v531 = vpop.permute.xlu0 %530
    %532 = vrot.lane.b32.xlu0 %v506, 32
    %v533 = vpop.permute.xlu0 %532
    %534 = vrot.lane.b32.xlu0 %v507, 32
    %v535 = vpop.permute.xlu0 %534
    %v536 = vld [vmem:[#allocation7 + $0x60] sm:$0xff]
    %v537 = vld [vmem:[#allocation7 + $0x68] sm:$0xff]
    %v538 = vld [vmem:[#allocation7 + $0x70] sm:$0xff]
    %v539 = vld [vmem:[#allocation7 + $0x78] sm:$0xff]
    %v540 = vsel %vm66, %v504, 0
    %v542 = vsel %vm66, %v505, 0
    %v544 = vsel %vm66, %v506, 0
    %v546 = vsel %vm66, %v507, 0
    %v548 = vsel %vm66, %v513, 0
    %v550 = vsel %vm66, %v515, 0
    %v552 = vsel %vm66, %v517, 0
    %v554 = vsel %vm66, %v519, 0
    %v556 = vsel %vm66, %v521, 0
    %v558 = vsel %vm66, %v523, 0
    %v560 = vsel %vm66, %v525, 0
    %v562 = vsel %vm66, %v527, 0
    %v564 = vsel %vm66, %v529, 0
    %v566 = vsel %vm66, %v531, 0
    %v568 = vsel %vm66, %v533, 0
    %v570 = vsel %vm66, %v535, 0
    %572 = vmatpush.msra.mxu0 0.0
    %573 = vmatpush.msra.mxu0 0.0
    %574 = vmatpush.msra.mxu0 0.0
    %575 = vmatpush.msra.mxu0 0.0
    %576 = vmatpush.msra.mxu0 0.0
    %577 = vmatpush.msra.mxu0 0.0
    %578 = vmatpush.msra.mxu0 0.0
    %579 = vmatpush.msra.mxu0 0.0
    %580 = vmatpush.msra.mxu0 0.0
    %581 = vmatpush.msra.mxu0 0.0
    %582 = vmatpush.msra.mxu0 0.0
    %583 = vmatpush.msra.mxu0 0.0
    %584 = vmatpush.msra.mxu0 %v539
    %585 = vmatpush.msra.mxu0 %v538
    %586 = vmatpush.msra.mxu0 %v537
    %587 = vmatpush.msra.mxu0 %v536
    %588 = vmatmul.f32.gmra.mxu0 %v540
    %v589 = vpop.f32.mrf.mxu0
    %v590 = vadd.f32 0.0, %v589
    %591 = vmatmul.f32.gmra.mxu0 %v542
    %v592 = vpop.f32.mrf.mxu0
    %v593 = vadd.f32 0.0, %v592
    %594 = vmatmul.f32.gmra.mxu0 %v544
    %v595 = vpop.f32.mrf.mxu0
    %v596 = vadd.f32 0.0, %v595
    %597 = vmatmul.f32.gmra.mxu0 %v546
    %v598 = vpop.f32.mrf.mxu0
    %v599 = vadd.f32 0.0, %v598
    %600 = vmatmul.f32.gmra.mxu0 %v548
    %v601 = vpop.f32.mrf.mxu0
    %v602 = vadd.f32 0.0, %v601
    %603 = vmatmul.f32.gmra.mxu0 %v550
    %v604 = vpop.f32.mrf.mxu0
    %v605 = vadd.f32 0.0, %v604
    %606 = vmatmul.f32.gmra.mxu0 %v552
    %v607 = vpop.f32.mrf.mxu0
    %v608 = vadd.f32 0.0, %v607
    %609 = vmatmul.f32.gmra.mxu0 %v554
    %v610 = vpop.f32.mrf.mxu0
    %v611 = vadd.f32 0.0, %v610
    %612 = vmatmul.f32.gmra.mxu0 %v556
    %v613 = vpop.f32.mrf.mxu0
    %v614 = vadd.f32 0.0, %v613
    %615 = vmatmul.f32.gmra.mxu0 %v558
    %v616 = vpop.f32.mrf.mxu0
    %v617 = vadd.f32 0.0, %v616
    %618 = vmatmul.f32.gmra.mxu0 %v560
    %v619 = vpop.f32.mrf.mxu0
    %v620 = vadd.f32 0.0, %v619
    %621 = vmatmul.f32.gmra.mxu0 %v562
    %v622 = vpop.f32.mrf.mxu0
    %v623 = vadd.f32 0.0, %v622
    %624 = vmatmul.f32.gmra.mxu0 %v564
    %v625 = vpop.f32.mrf.mxu0
    %v626 = vadd.f32 0.0, %v625
    %627 = vmatmul.f32.gmra.mxu0 %v566
    %v628 = vpop.f32.mrf.mxu0
    %v629 = vadd.f32 0.0, %v628
    %630 = vmatmul.f32.gmra.mxu0 %v568
    %v631 = vpop.f32.mrf.mxu0
    %v632 = vadd.f32 0.0, %v631
    %633 = vmatmul.f32.gmra.mxu0 %v570
    %v634 = vpop.f32.mrf.mxu0
    %v635 = vadd.f32 0.0, %v634
    %636 = vdwg.mxu0
    %v637 = vperm.slane %v59, 3
    %v638 = vmul.f32 %v590, %v637
    %v639 = vmul.f32 %v593, %v637
    %v640 = vmul.f32 %v596, %v637
    %v641 = vmul.f32 %v599, %v637
    %v642 = vmul.f32 %v602, %v637
    %v643 = vmul.f32 %v605, %v637
    %v644 = vmul.f32 %v608, %v637
    %v645 = vmul.f32 %v611, %v637
    %v646 = vmul.f32 %v614, %v637
    %v647 = vmul.f32 %v617, %v637
    %v648 = vmul.f32 %v620, %v637
    %v649 = vmul.f32 %v623, %v637
    %v650 = vmul.f32 %v626, %v637
    %v651 = vmul.f32 %v629, %v637
    %v652 = vmul.f32 %v632, %v637
    %v653 = vmul.f32 %v635, %v637
    %v654 = vperm.slane %v59, 4
    %v655 = vadd.f32 %v638, %v654
    %v656 = vadd.f32 %v639, %v654
    %v657 = vadd.f32 %v640, %v654
    %v658 = vadd.f32 %v641, %v654
    %v659 = vadd.f32 %v642, %v654
    %v660 = vadd.f32 %v643, %v654
    %v661 = vadd.f32 %v644, %v654
    %v662 = vadd.f32 %v645, %v654
    %v663 = vadd.f32 %v646, %v654
    %v664 = vadd.f32 %v647, %v654
    %v665 = vadd.f32 %v648, %v654
    %v666 = vadd.f32 %v649, %v654
    %v667 = vadd.f32 %v650, %v654
    %v668 = vadd.f32 %v651, %v654
    %v669 = vadd.f32 %v652, %v654
    %v670 = vadd.f32 %v653, %v654
    %v671 = vmax.f32 %v655, 0.0
    %v672 = vmax.f32 %v656, 0.0
    %v673 = vmax.f32 %v657, 0.0
    %v674 = vmax.f32 %v658, 0.0
    %v675 = vmax.f32 %v659, 0.0
    %v676 = vmax.f32 %v660, 0.0
    %v677 = vmax.f32 %v661, 0.0
    %v678 = vmax.f32 %v662, 0.0
    %v679 = vmax.f32 %v663, 0.0
    %v680 = vmax.f32 %v664, 0.0
    %v681 = vmax.f32 %v665, 0.0
    %v682 = vmax.f32 %v666, 0.0
    %v683 = vmax.f32 %v667, 0.0
    %v684 = vmax.f32 %v668, 0.0
    %v685 = vmax.f32 %v669, 0.0
    %v686 = vmax.f32 %v670, 0.0
    %v687 = vld [vmem:[#allocation7 + $0x80] sm:$0xff]
    %v688 = vld [vmem:[#allocation7 + $0x88] sm:$0xff]
    %v689 = vld [vmem:[#allocation7 + $0x90] sm:$0xff]
    %v690 = vld [vmem:[#allocation7 + $0x98] sm:$0xff]
    %v691 = vld [vmem:[#allocation7 + $0xa0] sm:$0xff]
    %v692 = vld [vmem:[#allocation7 + $0xa8] sm:$0xff]
    %v693 = vld [vmem:[#allocation7 + $0xb0] sm:$0xff]
    %v694 = vld [vmem:[#allocation7 + $0xb8] sm:$0xff]
    %v696 = vsel %vm452, %v671, 0
    %v699 = vsel %vm452, %v672, 0
    %v702 = vsel %vm452, %v673, 0
    %v705 = vsel %vm452, %v674, 0
    %v708 = vsel %vm452, %v675, 0
    %v711 = vsel %vm452, %v676, 0
    %v714 = vsel %vm452, %v677, 0
    %v717 = vsel %vm452, %v678, 0
    %v720 = vsel %vm452, %v679, 0
    %v723 = vsel %vm452, %v680, 0
    %v726 = vsel %vm452, %v681, 0
    %v729 = vsel %vm452, %v682, 0
    %v732 = vsel %vm452, %v683, 0
    %v735 = vsel %vm452, %v684, 0
    %v738 = vsel %vm452, %v685, 0
    %v741 = vsel %vm452, %v686, 0
    %743 = vmatpush.msra.mxu0 0.0
    %744 = vmatpush.msra.mxu0 0.0
    %745 = vmatpush.msra.mxu0 0.0
    %746 = vmatpush.msra.mxu0 0.0
    %747 = vmatpush.msra.mxu0 0.0
    %748 = vmatpush.msra.mxu0 0.0
    %749 = vmatpush.msra.mxu0 0.0
    %750 = vmatpush.msra.mxu0 0.0
    %751 = vmatpush.msra.mxu0 %v694
    %752 = vmatpush.msra.mxu0 %v693
    %753 = vmatpush.msra.mxu0 %v692
    %754 = vmatpush.msra.mxu0 %v691
    %755 = vmatpush.msra.mxu0 %v690
    %756 = vmatpush.msra.mxu0 %v689
    %757 = vmatpush.msra.mxu0 %v688
    %758 = vmatpush.msra.mxu0 %v687
    %759 = vmatmul.f32.gmra.mxu0 %v696
    %v760 = vpop.f32.mrf.mxu0
    %v761 = vadd.f32 0.0, %v760
    %762 = vmatmul.f32.gmra.mxu0 %v699
    %v763 = vpop.f32.mrf.mxu0
    %v764 = vadd.f32 0.0, %v763
    %765 = vmatmul.f32.gmra.mxu0 %v702
    %v766 = vpop.f32.mrf.mxu0
    %v767 = vadd.f32 0.0, %v766
    %768 = vmatmul.f32.gmra.mxu0 %v705
    %v769 = vpop.f32.mrf.mxu0
    %v770 = vadd.f32 0.0, %v769
    %771 = vmatmul.f32.gmra.mxu0 %v708
    %v772 = vpop.f32.mrf.mxu0
    %v773 = vadd.f32 0.0, %v772
    %774 = vmatmul.f32.gmra.mxu0 %v711
    %v775 = vpop.f32.mrf.mxu0
    %v776 = vadd.f32 0.0, %v775
    %777 = vmatmul.f32.gmra.mxu0 %v714
    %v778 = vpop.f32.mrf.mxu0
    %v779 = vadd.f32 0.0, %v778
    %780 = vmatmul.f32.gmra.mxu0 %v717
    %v781 = vpop.f32.mrf.mxu0
    %v782 = vadd.f32 0.0, %v781
    %783 = vmatmul.f32.gmra.mxu0 %v720
    %v784 = vpop.f32.mrf.mxu0
    %v785 = vadd.f32 0.0, %v784
    %786 = vmatmul.f32.gmra.mxu0 %v723
    %v787 = vpop.f32.mrf.mxu0
    %v788 = vadd.f32 0.0, %v787
    %789 = vmatmul.f32.gmra.mxu0 %v726
    %v790 = vpop.f32.mrf.mxu0
    %v791 = vadd.f32 0.0, %v790
    %792 = vmatmul.f32.gmra.mxu0 %v729
    %v793 = vpop.f32.mrf.mxu0
    %v794 = vadd.f32 0.0, %v793
    %795 = vmatmul.f32.gmra.mxu0 %v732
    %v796 = vpop.f32.mrf.mxu0
    %v797 = vadd.f32 0.0, %v796
    %798 = vmatmul.f32.gmra.mxu0 %v735
    %v799 = vpop.f32.mrf.mxu0
    %v800 = vadd.f32 0.0, %v799
    %801 = vmatmul.f32.gmra.mxu0 %v738
    %v802 = vpop.f32.mrf.mxu0
    %v803 = vadd.f32 0.0, %v802
    %804 = vmatmul.f32.gmra.mxu0 %v741
    %v805 = vpop.f32.mrf.mxu0
    %v806 = vadd.f32 0.0, %v805
    %807 = vdwg.mxu0
    %v808 = vperm.slane %v59, 5
    %v809 = vmul.f32 %v761, %v808
    %v810 = vmul.f32 %v764, %v808
    %v811 = vmul.f32 %v767, %v808
    %v812 = vmul.f32 %v770, %v808
    %v813 = vmul.f32 %v773, %v808
    %v814 = vmul.f32 %v776, %v808
    %v815 = vmul.f32 %v779, %v808
    %v816 = vmul.f32 %v782, %v808
    %v817 = vmul.f32 %v785, %v808
    %v818 = vmul.f32 %v788, %v808
    %v819 = vmul.f32 %v791, %v808
    %v820 = vmul.f32 %v794, %v808
    %v821 = vmul.f32 %v797, %v808
    %v822 = vmul.f32 %v800, %v808
    %v823 = vmul.f32 %v803, %v808
    %v824 = vmul.f32 %v806, %v808
    %v825 = vperm.slane %v59, 6
    %v826 = vadd.f32 %v809, %v825
    %v827 = vadd.f32 %v810, %v825
    %v828 = vadd.f32 %v811, %v825
    %v829 = vadd.f32 %v812, %v825
    %v830 = vadd.f32 %v813, %v825
    %v831 = vadd.f32 %v814, %v825
    %v832 = vadd.f32 %v815, %v825
    %v833 = vadd.f32 %v816, %v825
    %v834 = vadd.f32 %v817, %v825
    %v835 = vadd.f32 %v818, %v825
    %v836 = vadd.f32 %v819, %v825
    %v837 = vadd.f32 %v820, %v825
    %v838 = vadd.f32 %v821, %v825
    %v839 = vadd.f32 %v822, %v825
    %v840 = vadd.f32 %v823, %v825
    %v841 = vadd.f32 %v824, %v825
    %v842 = vmax.f32 %v826, 0.0
    %v843 = vmax.f32 %v827, 0.0
    %v844 = vmax.f32 %v828, 0.0
    %v845 = vmax.f32 %v829, 0.0
    %v846 = vmax.f32 %v830, 0.0
    %v847 = vmax.f32 %v831, 0.0
    %v848 = vmax.f32 %v832, 0.0
    %v849 = vmax.f32 %v833, 0.0
    %v850 = vmax.f32 %v834, 0.0
    %v851 = vmax.f32 %v835, 0.0
    %v852 = vmax.f32 %v836, 0.0
    %v853 = vmax.f32 %v837, 0.0
    %v854 = vmax.f32 %v838, 0.0
    %v855 = vmax.f32 %v839, 0.0
    %v856 = vmax.f32 %v840, 0.0
    %v857 = vmax.f32 %v841, 0.0
    %858 = vst.msk [vmem:[%s3] sm:$0xff] %vm452, %v842
    %859 = vst.msk [vmem:[%s3 + $0x8] sm:$0xff] %vm452, %v843
    %860 = vst.msk [vmem:[%s3 + $0x10] sm:$0xff] %vm452, %v844
    %861 = vst.msk [vmem:[%s3 + $0x18] sm:$0xff] %vm452, %v845
    %862 = vst.msk [vmem:[%s3 + $0x20] sm:$0xff] %vm452, %v846
    %863 = vst.msk [vmem:[%s3 + $0x28] sm:$0xff] %vm452, %v847
    %864 = vst.msk [vmem:[%s3 + $0x30] sm:$0xff] %vm452, %v848
    %865 = vst.msk [vmem:[%s3 + $0x38] sm:$0xff] %vm452, %v849
    %866 = vst.msk [vmem:[%s3 + $0x40] sm:$0xff] %vm452, %v850
    %867 = vst.msk [vmem:[%s3 + $0x48] sm:$0xff] %vm452, %v851
    %868 = vst.msk [vmem:[%s3 + $0x50] sm:$0xff] %vm452, %v852
    %869 = vst.msk [vmem:[%s3 + $0x58] sm:$0xff] %vm452, %v853
    %870 = vst.msk [vmem:[%s3 + $0x60] sm:$0xff] %vm452, %v854
    %871 = vst.msk [vmem:[%s3 + $0x68] sm:$0xff] %vm452, %v855
    %872 = vst.msk [vmem:[%s3 + $0x70] sm:$0xff] %vm452, %v856
    %873 = vst.msk [vmem:[%s3 + $0x78] sm:$0xff] %vm452, %v857
    // Predicated region
    $region26: #{decoder_forward.1} parent=1 // pred_check
      _
    $region27: #{decoder_forward.1} parent=1 // pred_check_branch
      %875 = sbr.rel (0) target = $region29
    $region28: #{decoder_forward.1} parent=1 // pred_region
      _
    $region29: #{decoder_forward.1} parent=1 // pred_fallthru
      _
    // Predicated region
    $region30: #{decoder_forward.1} parent=1 // pred_check
      _
    $region31: #{decoder_forward.1} parent=1 // pred_check_branch
      %877 = sbr.rel (0) target = $region33
    $region32: #{decoder_forward.1} parent=1 // pred_region
      _
    $region33: #{decoder_forward.1} parent=1 // pred_fallthru
      _
    %878 = vsyncpa [#allocation4], 1
    %879 = vsyncpa [#allocation6], 1

</llo_original>
